<compile_context>
chip_gen: v6e
topology: v6e:2x2x1
jax: 0.10.0
libtpu: 0.0.40
codegen_flags: <defaults>
</compile_context>

<pallas_src>
import functools
import math

import jax
import jax.numpy as jnp
from jax import lax
from jax.experimental import pallas as pl
from jax.experimental.pallas import tpu as pltpu

_LANE = 128     # lane (last-dim) tiling unit
_SUBLANE = 8    # sublane (second-to-last-dim) tiling unit


def _round_up(x, m):
    return (x + m - 1) // m * m


# ---------------------------------------------------------------------------
# Kernel 1: one-shot per-layer weight prep (independent of batch).
#   WG_l = concat([tanh(W_hat_l) * sigmoid(M_hat_l), G_l], axis=0)
# ---------------------------------------------------------------------------
def _prep_weights_kernel(*refs):
    n_layers = len(refs) // 4                      # 3 inputs + 1 output per layer
    in_refs, out_refs = refs[:3 * n_layers], refs[3 * n_layers:]
    for l in range(n_layers):                      # static unroll over layers
        w_hat = in_refs[3 * l][...]
        m_hat = in_refs[3 * l + 1][...]
        g_w = in_refs[3 * l + 2][...]
        nac_w = jnp.tanh(w_hat) * jax.nn.sigmoid(m_hat)    # NAC weight
        out_refs[l][...] = jnp.concatenate([nac_w, g_w], axis=0)


def _prep_weights(padded_params):
    """padded_params: list of (W_hat, M_hat, G), each (out_p, in_p) float32."""
    full2d = lambda shape: pl.BlockSpec(shape, lambda: (0, 0))
    flat_in, in_specs, out_shapes, out_specs = [], [], [], []
    for w_hat, m_hat, g_w in padded_params:
        out_p, in_p = w_hat.shape
        flat_in += [w_hat, m_hat, g_w]
        in_specs += [full2d((out_p, in_p))] * 3
        out_shapes.append(jax.ShapeDtypeStruct((2 * out_p, in_p), jnp.float32))
        out_specs.append(full2d((2 * out_p, in_p)))
    out = pl.pallas_call(
        _prep_weights_kernel,
        out_shape=tuple(out_shapes),
        in_specs=in_specs,
        out_specs=tuple(out_specs),
    )(*flat_in)
    return list(out) if isinstance(out, (tuple, list)) else [out]


# ---------------------------------------------------------------------------
# Kernel 2: fused NALU-sinh layer stack over one batch tile.
# ---------------------------------------------------------------------------
def _fused_stack_kernel(x_ref, *wg_and_out_refs):
    wg_refs = wg_and_out_refs[:-1]                 # one combined [W ; G] per layer
    o_ref = wg_and_out_refs[-1]

    h = x_ref[...]                                 # (TB, in_p) f32
    tb = h.shape[0]
    for wg_ref in wg_refs:                         # statically unrolled over layers
        wg = wg_ref[...]                           # (2*out_p, in_p): [NAC-W ; G]
        out_p = wg.shape[0] // 2

        # asinh exactly as the reference module: log(h + sqrt(h^2 + 1)).
        # (Unstable for large-magnitude negative h, matching torch's formula.)
        log_h = jnp.log(h + jnp.sqrt(h * h + 1.0))

        # Single MXU pass: [h ; asinh(h)] x [W ; G]^T, contracting dim 1 of
        # both operands (no in-kernel transpose).
        lhs = jnp.concatenate([h, log_h], axis=0)                  # (2*TB, in_p)
        res = lax.dot_general(
            lhs, wg, dimension_numbers=(((1,), (1,)), ((), ())),
            preferred_element_type=jnp.float32)                    # (2*TB, 2*out_p)

        a = res[:tb, :out_p]          # NAC(h)
        g_pre = res[:tb, out_p:]      # h @ G^T
        z = res[tb:, :out_p]          # NAC(asinh(h))

        g = jax.nn.sigmoid(g_pre)
        # sinh(z) = (e - 1/e) / 2 with a single exp; the approximate reciprocal
        # runs on the EUP vrcp path (~2^-12 rel. error). Set approx=False for
        # bit-tighter agreement with (exp(z) - exp(-z)) / 2.
        e = jnp.exp(z)
        m = (e - pl.reciprocal(e, approx=True)) * 0.5
        # gated blend: g*a + (1-g)*m == m + g*(a - m)
        h = m + g * (a - m)

    o_ref[...] = h.astype(o_ref.dtype)


# ---------------------------------------------------------------------------
# Wrapper
# ---------------------------------------------------------------------------
@functools.partial(jax.jit, static_argnames=("tile_b",))
def nalu_sinh_forward(x, params, *, tile_b=256):
    """Forward pass of the NALU_sinh stack. x: (batch, in_dim) float32."""
    batch, in_dim = x.shape
    n_layers = len(params)

    # Feature dims padded to lane multiples. Zero padding is exact here:
    # padded weight rows/cols are 0, asinh(0) = 0, sinh(0) = 0, so padded
    # output columns are exactly 0 and contribute nothing downstream.
    dims = [in_dim] + [p["W_hat"].shape[0] for p in params]
    dims_p = [_round_up(max(d, 1), _LANE) for d in dims]

    tb = min(_round_up(batch, _SUBLANE), tile_b)
    batch_p = _round_up(batch, tb)

    x_p = jnp.pad(x.astype(jnp.float32),
                  ((0, batch_p - batch), (0, dims_p[0] - in_dim)))

    padded_params = []
    for i, p in enumerate(params):
        d_out, d_in = p["W_hat"].shape
        pad = ((0, dims_p[i + 1] - d_out), (0, dims_p[i] - d_in))
        padded_params.append((jnp.pad(p["W_hat"].astype(jnp.float32), pad),
                              jnp.pad(p["M_hat"].astype(jnp.float32), pad),
                              jnp.pad(p["G"].astype(jnp.float32), pad)))

    # 1) build the per-layer fused [NAC-W ; G] matrices once (not per tile).
    wg_list = _prep_weights(padded_params)

    # 2) one fused pallas_call for the whole layer stack, tiled over batch.
    grid = (batch_p // tb,)
    in_specs = [pl.BlockSpec((tb, dims_p[0]), lambda i: (i, 0))]
    for l in range(n_layers):
        in_specs.append(
            pl.BlockSpec((2 * dims_p[l + 1], dims_p[l]), lambda i: (0, 0)))
    out_specs = pl.BlockSpec((tb, dims_p[-1]), lambda i: (i, 0))

    out_p = pl.pallas_call(
        _fused_stack_kernel,
        out_shape=jax.ShapeDtypeStruct((batch_p, dims_p[-1]), jnp.float32),
        grid_spec=pltpu.PrefetchScalarGridSpec(
            num_scalar_prefetch=0,
            grid=grid,
            in_specs=in_specs,
            out_specs=out_specs),
        compiler_params=pltpu.CompilerParams(
            dimension_semantics=("parallel",)),   # megacore sharding on v7x
    )(x_p, *wg_list)

    return out_p[:batch, :dims[-1]]


# ---------------------------------------------------------------------------
# Parameter init (matches torch.nn.init.kaiming_uniform_(a=sqrt(5)))
# ---------------------------------------------------------------------------
def _kaiming_uniform(key, shape, a=math.sqrt(5)):
    fan_in = shape[1]
    gain = math.sqrt(2.0 / (1.0 + a * a))
    bound = gain * math.sqrt(3.0 / fan_in)
    return jax.random.uniform(key, shape, jnp.float32, minval=-bound, maxval=bound)


def init_nalu_sinh_params(key, num_layers, in_dim, hidden_dim, out_dim):
    params = []
    for i in range(num_layers):
        d_in = hidden_dim if i > 0 else in_dim
        d_out = hidden_dim if i < num_layers - 1 else out_dim
        key, k_g, k_w, k_m = jax.random.split(key, 4)
        params.append({
            "G": _kaiming_uniform(k_g, (d_out, d_in)),
            "W_hat": _kaiming_uniform(k_w, (d_out, d_in)),
            "M_hat": _kaiming_uniform(k_m, (d_out, d_in)),
        })
    return params


# Pure-JAX reference (mirrors the PyTorch module) for a tolerance check.
def _reference_forward(x, params):
    h = x
    for p in params:
        w = jnp.tanh(p["W_hat"]) * jax.nn.sigmoid(p["M_hat"])
        a = h @ w.T
        g = jax.nn.sigmoid(h @ p["G"].T)
        log_h = jnp.log(h + jnp.sqrt(h * h + 1.0))
        z = log_h @ w.T
        m = (jnp.exp(z) - jnp.exp(-z)) * 0.5
        h = g * a + (1.0 - g) * m
    return h


if __name__ == "__main__":
    num_layers, in_dim, hidden_dim, out_dim = 2, 16, 32, 8
    batch = 8

    key = jax.random.PRNGKey(0)
    key, k_x = jax.random.split(key)
    x = jax.random.normal(k_x, (batch, in_dim), dtype=jnp.float32)

    params = init_nalu_sinh_params(key, num_layers, in_dim, hidden_dim, out_dim)

    y = nalu_sinh_forward(x, params)
    jax.block_until_ready(y)

    y_ref = _reference_forward(x, params)
    assert y.shape == (batch, out_dim)
    assert jnp.all(jnp.isfinite(y))
    assert jnp.allclose(y, y_ref, atol=1e-2, rtol=1e-2)
    print("KERNEL_OK")
</pallas_src>

<mosaic_0001>
module attributes {stable_mosaic.version = 11 : i64} {
  func.func @_prep_weights_kernel(%arg0: memref<128x128xf32, #tpu.memory_space<vmem>>, %arg1: memref<128x128xf32, #tpu.memory_space<vmem>>, %arg2: memref<128x128xf32, #tpu.memory_space<vmem>>, %arg3: memref<128x128xf32, #tpu.memory_space<vmem>>, %arg4: memref<128x128xf32, #tpu.memory_space<vmem>>, %arg5: memref<128x128xf32, #tpu.memory_space<vmem>>, %arg6: memref<256x128xf32, #tpu.memory_space<vmem>>, %arg7: memref<256x128xf32, #tpu.memory_space<vmem>>) attributes {dimension_semantics = [], scalar_prefetch = 0 : i64, scratch_operands = 0 : i64, tpu.core_type = #tpu.core_type<tc>} {
    %c0 = arith.constant 0 : index
    %c0_0 = arith.constant 0 : index
    %0 = vector.load %arg0[%c0, %c0_0] : memref<128x128xf32, #tpu.memory_space<vmem>>, vector<128x128xf32>
    %c0_1 = arith.constant 0 : index
    %c0_2 = arith.constant 0 : index
    %1 = vector.load %arg1[%c0_1, %c0_2] : memref<128x128xf32, #tpu.memory_space<vmem>>, vector<128x128xf32>
    %c0_3 = arith.constant 0 : index
    %c0_4 = arith.constant 0 : index
    %2 = vector.load %arg2[%c0_3, %c0_4] : memref<128x128xf32, #tpu.memory_space<vmem>>, vector<128x128xf32>
    %3 = math.tanh %0 : vector<128x128xf32>
    %4 = arith.negf %1 : vector<128x128xf32>
    %5 = math.exp %4 : vector<128x128xf32>
    %cst = arith.constant 1.000000e+00 : f32
    %6 = vector.broadcast %cst : f32 to vector<128x128xf32>
    %7 = arith.addf %6, %5 : vector<128x128xf32>
    %8 = arith.divf %6, %7 : vector<128x128xf32>
    %9 = arith.mulf %3, %8 : vector<128x128xf32>
    %10 = tpu.concatenate %9, %2 in 0 : vector<128x128xf32>, vector<128x128xf32> -> vector<256x128xf32>
    %c0_5 = arith.constant 0 : index
    %c0_6 = arith.constant 0 : index
    %11 = vector.load %arg6[%c0_5, %c0_6] : memref<256x128xf32, #tpu.memory_space<vmem>>, vector<256x128xf32>
    tpu.vector_store %arg6[%c0_5, %c0_6], %10 {strides = array<i32>} : memref<256x128xf32, #tpu.memory_space<vmem>>, vector<256x128xf32>,
    %c0_7 = arith.constant 0 : index
    %c0_8 = arith.constant 0 : index
    %12 = vector.load %arg3[%c0_7, %c0_8] : memref<128x128xf32, #tpu.memory_space<vmem>>, vector<128x128xf32>
    %c0_9 = arith.constant 0 : index
    %c0_10 = arith.constant 0 : index
    %13 = vector.load %arg4[%c0_9, %c0_10] : memref<128x128xf32, #tpu.memory_space<vmem>>, vector<128x128xf32>
    %c0_11 = arith.constant 0 : index
    %c0_12 = arith.constant 0 : index
    %14 = vector.load %arg5[%c0_11, %c0_12] : memref<128x128xf32, #tpu.memory_space<vmem>>, vector<128x128xf32>
    %15 = math.tanh %12 : vector<128x128xf32>
    %16 = arith.negf %13 : vector<128x128xf32>
    %17 = math.exp %16 : vector<128x128xf32>
    %cst_13 = arith.constant 1.000000e+00 : f32
    %18 = vector.broadcast %cst_13 : f32 to vector<128x128xf32>
    %19 = arith.addf %18, %17 : vector<128x128xf32>
    %20 = arith.divf %18, %19 : vector<128x128xf32>
    %21 = arith.mulf %15, %20 : vector<128x128xf32>
    %22 = tpu.concatenate %21, %14 in 0 : vector<128x128xf32>, vector<128x128xf32> -> vector<256x128xf32>
    %c0_14 = arith.constant 0 : index
    %c0_15 = arith.constant 0 : index
    %23 = vector.load %arg7[%c0_14, %c0_15] : memref<256x128xf32, #tpu.memory_space<vmem>>, vector<256x128xf32>
    tpu.vector_store %arg7[%c0_14, %c0_15], %22 {strides = array<i32>} : memref<256x128xf32, #tpu.memory_space<vmem>>, vector<256x128xf32>,
    return
  }
}

module attributes {stable_mosaic.version = 11 : i64} {
  func.func @_fused_stack_kernel(%arg0: i32, %arg1: memref<8x128xf32, #tpu.memory_space<vmem>>, %arg2: memref<256x128xf32, #tpu.memory_space<vmem>>, %arg3: memref<256x128xf32, #tpu.memory_space<vmem>>, %arg4: memref<8x128xf32, #tpu.memory_space<vmem>>) attributes {dimension_semantics = [#tpu.dimension_semantics<parallel>], iteration_bounds = array<i64: 1>, scalar_prefetch = 0 : i64, scratch_operands = 0 : i64, tpu.core_type = #tpu.core_type<tc>, window_params = [{transform_indices = @transform_0, window_bounds = array<i64: 8, 128>}, {pipeline_mode = #tpu.pipeline_mode<synchronous>, transform_indices = @transform_1, window_bounds = array<i64: 256, 128>}, {pipeline_mode = #tpu.pipeline_mode<synchronous>, transform_indices = @transform_2, window_bounds = array<i64: 256, 128>}, {transform_indices = @transform_3, window_bounds = array<i64: 8, 128>}]} {
    %c0 = arith.constant 0 : index
    %c0_0 = arith.constant 0 : index
    %0 = vector.load %arg1[%c0, %c0_0] : memref<8x128xf32, #tpu.memory_space<vmem>>, vector<8x128xf32>
    %c0_1 = arith.constant 0 : index
    %c0_2 = arith.constant 0 : index
    %1 = vector.load %arg2[%c0_1, %c0_2] : memref<256x128xf32, #tpu.memory_space<vmem>>, vector<256x128xf32>
    %2 = arith.mulf %0, %0 : vector<8x128xf32>
    %cst = arith.constant 1.000000e+00 : f32
    %3 = vector.broadcast %cst : f32 to vector<8x128xf32>
    %4 = arith.addf %2, %3 : vector<8x128xf32>
    %5 = math.sqrt %4 : vector<8x128xf32>
    %6 = arith.addf %0, %5 : vector<8x128xf32>
    %7 = math.log %6 : vector<8x128xf32>
    %8 = tpu.concatenate %0, %7 in 0 : vector<8x128xf32>, vector<8x128xf32> -> vector<16x128xf32>
    %cst_3 = arith.constant dense<0.000000e+00> : vector<16x256xf32>
    %9 = tpu.matmul %8, %1, %cst_3 {dimension_numbers = #tpu.dot_dimension_numbers<[1], [1], [0], [0], [0, 0, 1, 0], [], []>} : vector<16x128xf32>, vector<256x128xf32>, vector<16x256xf32> -> vector<16x256xf32>
    %10 = vector.extract_strided_slice %9 {offsets = [0, 0], sizes = [8, 128], strides = [1, 1]} : vector<16x256xf32> to vector<8x128xf32>
    %11 = vector.extract_strided_slice %9 {offsets = [0, 128], sizes = [8, 128], strides = [1, 1]} : vector<16x256xf32> to vector<8x128xf32>
    %12 = vector.extract_strided_slice %9 {offsets = [8, 0], sizes = [8, 128], strides = [1, 1]} : vector<16x256xf32> to vector<8x128xf32>
    %13 = arith.negf %11 : vector<8x128xf32>
    %14 = math.exp %13 : vector<8x128xf32>
    %cst_4 = arith.constant 1.000000e+00 : f32
    %15 = vector.broadcast %cst_4 : f32 to vector<8x128xf32>
    %16 = arith.addf %15, %14 : vector<8x128xf32>
    %17 = arith.divf %15, %16 : vector<8x128xf32>
    %18 = math.exp %12 : vector<8x128xf32>
    %19 = tpu.reciprocal %18 {approx = true} : vector<8x128xf32> -> vector<8x128xf32>
    %20 = arith.subf %18, %19 : vector<8x128xf32>
    %cst_5 = arith.constant 5.000000e-01 : f32
    %21 = vector.broadcast %cst_5 : f32 to vector<8x128xf32>
    %22 = arith.mulf %20, %21 : vector<8x128xf32>
    %23 = arith.subf %10, %22 : vector<8x128xf32>
    %24 = arith.mulf %17, %23 : vector<8x128xf32>
    %25 = arith.addf %22, %24 : vector<8x128xf32>
    %c0_6 = arith.constant 0 : index
    %c0_7 = arith.constant 0 : index
    %26 = vector.load %arg3[%c0_6, %c0_7] : memref<256x128xf32, #tpu.memory_space<vmem>>, vector<256x128xf32>
    %27 = arith.mulf %25, %25 : vector<8x128xf32>
    %cst_8 = arith.constant 1.000000e+00 : f32
    %28 = vector.broadcast %cst_8 : f32 to vector<8x128xf32>
    %29 = arith.addf %27, %28 : vector<8x128xf32>
    %30 = math.sqrt %29 : vector<8x128xf32>
    %31 = arith.addf %25, %30 : vector<8x128xf32>
    %32 = math.log %31 : vector<8x128xf32>
    %33 = tpu.concatenate %25, %32 in 0 : vector<8x128xf32>, vector<8x128xf32> -> vector<16x128xf32>
    %cst_9 = arith.constant dense<0.000000e+00> : vector<16x256xf32>
    %34 = tpu.matmul %33, %26, %cst_9 {dimension_numbers = #tpu.dot_dimension_numbers<[1], [1], [0], [0], [0, 0, 1, 0], [], []>} : vector<16x128xf32>, vector<256x128xf32>, vector<16x256xf32> -> vector<16x256xf32>
    %35 = vector.extract_strided_slice %34 {offsets = [0, 0], sizes = [8, 128], strides = [1, 1]} : vector<16x256xf32> to vector<8x128xf32>
    %36 = vector.extract_strided_slice %34 {offsets = [0, 128], sizes = [8, 128], strides = [1, 1]} : vector<16x256xf32> to vector<8x128xf32>
    %37 = vector.extract_strided_slice %34 {offsets = [8, 0], sizes = [8, 128], strides = [1, 1]} : vector<16x256xf32> to vector<8x128xf32>
    %38 = arith.negf %36 : vector<8x128xf32>
    %39 = math.exp %38 : vector<8x128xf32>
    %cst_10 = arith.constant 1.000000e+00 : f32
    %40 = vector.broadcast %cst_10 : f32 to vector<8x128xf32>
    %41 = arith.addf %40, %39 : vector<8x128xf32>
    %42 = arith.divf %40, %41 : vector<8x128xf32>
    %43 = math.exp %37 : vector<8x128xf32>
    %44 = tpu.reciprocal %43 {approx = true} : vector<8x128xf32> -> vector<8x128xf32>
    %45 = arith.subf %43, %44 : vector<8x128xf32>
    %cst_11 = arith.constant 5.000000e-01 : f32
    %46 = vector.broadcast %cst_11 : f32 to vector<8x128xf32>
    %47 = arith.mulf %45, %46 : vector<8x128xf32>
    %48 = arith.subf %35, %47 : vector<8x128xf32>
    %49 = arith.mulf %42, %48 : vector<8x128xf32>
    %50 = arith.addf %47, %49 : vector<8x128xf32>
    %c0_12 = arith.constant 0 : index
    %c0_13 = arith.constant 0 : index
    %51 = vector.load %arg4[%c0_12, %c0_13] : memref<8x128xf32, #tpu.memory_space<vmem>>, vector<8x128xf32>
    tpu.vector_store %arg4[%c0_12, %c0_13], %50 {strides = array<i32>} : memref<8x128xf32, #tpu.memory_space<vmem>>, vector<8x128xf32>,
    return
  }
  func.func @transform_0(%arg0: i32) -> (i32, i32) {
    %c0_i32 = arith.constant 0 : i32
    %c0_i32_0 = arith.constant 0 : i32
    return %arg0, %c0_i32 : i32, i32
  }
  func.func @transform_1(%arg0: i32) -> (i32, i32) {
    %c0_i32 = arith.constant 0 : i32
    %c0_i32_0 = arith.constant 0 : i32
    %c0_i32_1 = arith.constant 0 : i32
    return %c0_i32, %c0_i32_0 : i32, i32
  }
  func.func @transform_2(%arg0: i32) -> (i32, i32) {
    %c0_i32 = arith.constant 0 : i32
    %c0_i32_0 = arith.constant 0 : i32
    %c0_i32_1 = arith.constant 0 : i32
    return %c0_i32, %c0_i32_0 : i32, i32
  }
  func.func @transform_3(%arg0: i32) -> (i32, i32) {
    %c0_i32 = arith.constant 0 : i32
    %c0_i32_0 = arith.constant 0 : i32
    return %arg0, %c0_i32 : i32, i32
  }
}

</mosaic_0001>

<llo_original>
// kernel: nalu_sinh_forward.3
$region0: #{nalu_sinh_forward.3}
  #allocation0 [shape = 'u32[]', space=smem, size = 0x4, offset = 0x4, fixed_abs, tag = 'smem constant byte address 0x4 - core index']
  #allocation1 [shape = 'u32[144,128]{1,0:T(1,128)}', space=vmem, size = 0x12000, scoped, tag = 'internal scratch']
  %s0 = inlined_call_operand.vmem [shape: f32[8,128], index: 0, kind: input, shape index: {}]
  %s1 = inlined_call_operand.vmem [shape: f32[256,128], index: 1, kind: input, shape index: {}]
  %s2 = inlined_call_operand.vmem [shape: f32[256,128], index: 2, kind: input, shape index: {}]
  %s3 = inlined_call_operand.hbm [shape: f32[8,128], index: 3, kind: output, shape index: {}]
  %s4 = sld [smem:[#allocation0]]
  $region22: #{nalu_sinh_forward.3} parent=0
    _
  %s6 = ssub.s32 1, %s4
  %s7 = scalar_select 0, %s6, %s4
  $region1: #{nalu_sinh_forward.3} parent=0
    #allocation2 [shape = 'u8[4096]{0}', space=vmem, size = 0x1000, scoped, tag = 'output window, operand 0, single buffered']
    #allocation3 [shape = 's32[1]{0}', space=sflag, size = 0x4, scoped, tag = 'scoped memory for nalu_sinh_forward.3']
    %8 = vsyncpa [#allocation3], 0
    // Predicated region
    $region2: #{nalu_sinh_forward.3} parent=1 // pred_check
      _
    $region3: #{nalu_sinh_forward.3} parent=1 // pred_check_branch
      %10 = sbr.rel (0) target = $region5
    $region4: #{nalu_sinh_forward.3} parent=1 // pred_region
      _
    $region5: #{nalu_sinh_forward.3} parent=1 // pred_fallthru
      _
    // Predicated region
    $region6: #{nalu_sinh_forward.3} parent=1 // pred_check
      _
    $region7: #{nalu_sinh_forward.3} parent=1 // pred_check_branch
      %12 = sbr.rel (0) target = $region9
    $region8: #{nalu_sinh_forward.3} parent=1 // pred_region
      _
    $region9: #{nalu_sinh_forward.3} parent=1 // pred_fallthru
      _
    // Predicated region
    $region10: #{nalu_sinh_forward.3} parent=1 // pred_check
      _
    $region11: #{nalu_sinh_forward.3} parent=1 // pred_check_branch
      %14 = sbr.rel (0) target = $region13
    $region12: #{nalu_sinh_forward.3} parent=1 // pred_region
      _
    $region13: #{nalu_sinh_forward.3} parent=1 // pred_fallthru
      _
    %v15 = vld [vmem:[%s0] sm:$0xff]
    %v16 = vld [vmem:[%s1] sm:$0xff]
    %v17 = vld [vmem:[%s1 + $0x8] sm:$0xff]
    %v18 = vld [vmem:[%s1 + $0x10] sm:$0xff]
    %v19 = vld [vmem:[%s1 + $0x18] sm:$0xff]
    %v20 = vld [vmem:[%s1 + $0x20] sm:$0xff]
    %v21 = vld [vmem:[%s1 + $0x28] sm:$0xff]
    %v22 = vld [vmem:[%s1 + $0x30] sm:$0xff]
    %v23 = vld [vmem:[%s1 + $0x38] sm:$0xff]
    %v24 = vld [vmem:[%s1 + $0x40] sm:$0xff]
    %v25 = vld [vmem:[%s1 + $0x48] sm:$0xff]
    %v26 = vld [vmem:[%s1 + $0x50] sm:$0xff]
    %v27 = vld [vmem:[%s1 + $0x58] sm:$0xff]
    %v28 = vld [vmem:[%s1 + $0x60] sm:$0xff]
    %v29 = vld [vmem:[%s1 + $0x68] sm:$0xff]
    %v30 = vld [vmem:[%s1 + $0x70] sm:$0xff]
    %v31 = vld [vmem:[%s1 + $0x78] sm:$0xff]
    %v32 = vld [vmem:[%s1 + $0x80] sm:$0xff]
    %v33 = vld [vmem:[%s1 + $0x88] sm:$0xff]
    %v34 = vld [vmem:[%s1 + $0x90] sm:$0xff]
    %v35 = vld [vmem:[%s1 + $0x98] sm:$0xff]
    %v36 = vld [vmem:[%s1 + $0xa0] sm:$0xff]
    %v37 = vld [vmem:[%s1 + $0xa8] sm:$0xff]
    %v38 = vld [vmem:[%s1 + $0xb0] sm:$0xff]
    %v39 = vld [vmem:[%s1 + $0xb8] sm:$0xff]
    %v40 = vld [vmem:[%s1 + $0xc0] sm:$0xff]
    %v41 = vld [vmem:[%s1 + $0xc8] sm:$0xff]
    %v42 = vld [vmem:[%s1 + $0xd0] sm:$0xff]
    %v43 = vld [vmem:[%s1 + $0xd8] sm:$0xff]
    %v44 = vld [vmem:[%s1 + $0xe0] sm:$0xff]
    %v45 = vld [vmem:[%s1 + $0xe8] sm:$0xff]
    %v46 = vld [vmem:[%s1 + $0xf0] sm:$0xff]
    %v47 = vld [vmem:[%s1 + $0xf8] sm:$0xff]
    %v48 = vmul.f32 %v15, %v15
    %v49 = vadd.f32 %v48, 1.0
    %v50 = vrsqrt.pop %v49
    %v51 = vmul.f32 %v49, %v50
    %vm52 = vcmp.eq.f32.partialorder %v49, inf
    %v53 = vsel %vm52, %v49, %v51
    %vm54 = vcmp.eq.f32.partialorder %v49, 0.0
    %v55 = vand.u32 %v49, 2147483648
    %v56 = vsel %vm54, %v55, %v53
    %v57 = vadd.f32 %v15, %v56
    %v58 = vlog2.pop %v57
    %v59 = vmul.f32 %v58, 0.6931472
    %60 = vmatprep.subr.mxu0 0.0
    %61 = vmatpush1.xpose.msra.mxu0 %v31
    %62 = vmatprep.subr.mxu0 0.0
    %63 = vmatpush1.xpose.msra.mxu0 %v30
    %64 = vmatprep.subr.mxu0 0.0
    %65 = vmatpush1.xpose.msra.mxu0 %v29
    %66 = vmatprep.subr.mxu0 0.0
    %67 = vmatpush1.xpose.msra.mxu0 %v28
    %68 = vmatprep.subr.mxu0 0.0
    %69 = vmatpush1.xpose.msra.mxu0 %v27
    %70 = vmatprep.subr.mxu0 0.0
    %71 = vmatpush1.xpose.msra.mxu0 %v26
    %72 = vmatprep.subr.mxu0 0.0
    %73 = vmatpush1.xpose.msra.mxu0 %v25
    %74 = vmatprep.subr.mxu0 0.0
    %75 = vmatpush1.xpose.msra.mxu0 %v24
    %76 = vmatprep.subr.mxu0 0.0
    %77 = vmatpush1.xpose.msra.mxu0 %v23
    %78 = vmatprep.subr.mxu0 0.0
    %79 = vmatpush1.xpose.msra.mxu0 %v22
    %80 = vmatprep.subr.mxu0 0.0
    %81 = vmatpush1.xpose.msra.mxu0 %v21
    %82 = vmatprep.subr.mxu0 0.0
    %83 = vmatpush1.xpose.msra.mxu0 %v20
    %84 = vmatprep.subr.mxu0 0.0
    %85 = vmatpush1.xpose.msra.mxu0 %v19
    %86 = vmatprep.subr.mxu0 0.0
    %87 = vmatpush1.xpose.msra.mxu0 %v18
    %88 = vmatprep.subr.mxu0 0.0
    %89 = vmatpush1.xpose.msra.mxu0 %v17
    %90 = vmatprep.subr.mxu0 0.0
    %91 = vmatpush1.xpose.msra.mxu0 %v16
    %92 = vmatprep.subr.mxu0 0.0
    %93 = vmatpush2.xpose.msra.mxu0 %v47
    %94 = vmatprep.subr.mxu0 0.0
    %95 = vmatpush2.xpose.msra.mxu0 %v46
    %96 = vmatprep.subr.mxu0 0.0
    %97 = vmatpush2.xpose.msra.mxu0 %v45
    %98 = vmatprep.subr.mxu0 0.0
    %99 = vmatpush2.xpose.msra.mxu0 %v44
    %100 = vmatprep.subr.mxu0 0.0
    %101 = vmatpush2.xpose.msra.mxu0 %v43
    %102 = vmatprep.subr.mxu0 0.0
    %103 = vmatpush2.xpose.msra.mxu0 %v42
    %104 = vmatprep.subr.mxu0 0.0
    %105 = vmatpush2.xpose.msra.mxu0 %v41
    %106 = vmatprep.subr.mxu0 0.0
    %107 = vmatpush2.xpose.msra.mxu0 %v40
    %108 = vmatprep.subr.mxu0 0.0
    %109 = vmatpush2.xpose.msra.mxu0 %v39
    %110 = vmatprep.subr.mxu0 0.0
    %111 = vmatpush2.xpose.msra.mxu0 %v38
    %112 = vmatprep.subr.mxu0 0.0
    %113 = vmatpush2.xpose.msra.mxu0 %v37
    %114 = vmatprep.subr.mxu0 0.0
    %115 = vmatpush2.xpose.msra.mxu0 %v36
    %116 = vmatprep.subr.mxu0 0.0
    %117 = vmatpush2.xpose.msra.mxu0 %v35
    %118 = vmatprep.subr.mxu0 0.0
    %119 = vmatpush2.xpose.msra.mxu0 %v34
    %120 = vmatprep.subr.mxu0 0.0
    %121 = vmatpush2.xpose.msra.mxu0 %v33
    %122 = vmatprep.subr.mxu0 0.0
    %123 = vmatpush2.xpose.msra.mxu0 %v32
    %124 = vmatprep.mubr.f32.mxu0 0.0
    %125 = vmatmul.mubr.f32.gmra.mxu0 %v15
    %v126 = vpop.f32.mrf.mxu0
    %v127 = vadd.f32 0.0, %v126
    %v128 = vpop.f32.mrf.mxu0
    %v129 = vadd.f32 0.0, %v128
    %130 = vmatprep.mubr.f32.mxu0 0.0
    %131 = vmatmul.mubr.f32.gmra.mxu0 %v59
    %v132 = vpop.f32.mrf.mxu0
    %v133 = vadd.f32 0.0, %v132
    %v134 = vpop.f32.mrf.mxu0
    %135 = vdwg.mxu0
    %v136 = vxor.u32 %v129, 2147483648
    %v137 = vmul.f32 %v136, 1.442695
    %v138 = vpow.pop %v137
    %v139 = vadd.f32 %v138, 1.0
    %v140 = vrcp.pop %v139
    %v141 = vmul.f32 1.0, %v140
    %v142 = vmul.f32 %v133, 1.442695
    %v143 = vpow.pop %v142
    %v144 = vrcp.pop %v143
    %v145 = vsub.f32 %v143, %v144
    %v146 = vmul.f32 %v145, 0.5
    %v147 = vsub.f32 %v127, %v146
    %v148 = vmul.f32 %v141, %v147
    %v149 = vadd.f32 %v146, %v148
    %v150 = vld [vmem:[%s2] sm:$0xff]
    %v151 = vld [vmem:[%s2 + $0x8] sm:$0xff]
    %v152 = vld [vmem:[%s2 + $0x10] sm:$0xff]
    %v153 = vld [vmem:[%s2 + $0x18] sm:$0xff]
    %v154 = vld [vmem:[%s2 + $0x20] sm:$0xff]
    %v155 = vld [vmem:[%s2 + $0x28] sm:$0xff]
    %v156 = vld [vmem:[%s2 + $0x30] sm:$0xff]
    %v157 = vld [vmem:[%s2 + $0x38] sm:$0xff]
    %v158 = vld [vmem:[%s2 + $0x40] sm:$0xff]
    %v159 = vld [vmem:[%s2 + $0x48] sm:$0xff]
    %v160 = vld [vmem:[%s2 + $0x50] sm:$0xff]
    %v161 = vld [vmem:[%s2 + $0x58] sm:$0xff]
    %v162 = vld [vmem:[%s2 + $0x60] sm:$0xff]
    %v163 = vld [vmem:[%s2 + $0x68] sm:$0xff]
    %v164 = vld [vmem:[%s2 + $0x70] sm:$0xff]
    %v165 = vld [vmem:[%s2 + $0x78] sm:$0xff]
    %v166 = vld [vmem:[%s2 + $0x80] sm:$0xff]
    %v167 = vld [vmem:[%s2 + $0x88] sm:$0xff]
    %v168 = vld [vmem:[%s2 + $0x90] sm:$0xff]
    %v169 = vld [vmem:[%s2 + $0x98] sm:$0xff]
    %v170 = vld [vmem:[%s2 + $0xa0] sm:$0xff]
    %v171 = vld [vmem:[%s2 + $0xa8] sm:$0xff]
    %v172 = vld [vmem:[%s2 + $0xb0] sm:$0xff]
    %v173 = vld [vmem:[%s2 + $0xb8] sm:$0xff]
    %v174 = vld [vmem:[%s2 + $0xc0] sm:$0xff]
    %v175 = vld [vmem:[%s2 + $0xc8] sm:$0xff]
    %v176 = vld [vmem:[%s2 + $0xd0] sm:$0xff]
    %v177 = vld [vmem:[%s2 + $0xd8] sm:$0xff]
    %v178 = vld [vmem:[%s2 + $0xe0] sm:$0xff]
    %v179 = vld [vmem:[%s2 + $0xe8] sm:$0xff]
    %v180 = vld [vmem:[%s2 + $0xf0] sm:$0xff]
    %v181 = vld [vmem:[%s2 + $0xf8] sm:$0xff]
    %v182 = vmul.f32 %v149, %v149
    %v183 = vadd.f32 %v182, 1.0
    %v184 = vrsqrt.pop %v183
    %v185 = vmul.f32 %v183, %v184
    %vm186 = vcmp.eq.f32.partialorder %v183, inf
    %v187 = vsel %vm186, %v183, %v185
    %vm188 = vcmp.eq.f32.partialorder %v183, 0.0
    %v189 = vand.u32 %v183, 2147483648
    %v190 = vsel %vm188, %v189, %v187
    %v191 = vadd.f32 %v149, %v190
    %v192 = vlog2.pop %v191
    %v193 = vmul.f32 %v192, 0.6931472
    %194 = vmatprep.subr.mxu0 0.0
    %195 = vmatpush1.xpose.msra.mxu0 %v165
    %196 = vmatprep.subr.mxu0 0.0
    %197 = vmatpush1.xpose.msra.mxu0 %v164
    %198 = vmatprep.subr.mxu0 0.0
    %199 = vmatpush1.xpose.msra.mxu0 %v163
    %200 = vmatprep.subr.mxu0 0.0
    %201 = vmatpush1.xpose.msra.mxu0 %v162
    %202 = vmatprep.subr.mxu0 0.0
    %203 = vmatpush1.xpose.msra.mxu0 %v161
    %204 = vmatprep.subr.mxu0 0.0
    %205 = vmatpush1.xpose.msra.mxu0 %v160
    %206 = vmatprep.subr.mxu0 0.0
    %207 = vmatpush1.xpose.msra.mxu0 %v159
    %208 = vmatprep.subr.mxu0 0.0
    %209 = vmatpush1.xpose.msra.mxu0 %v158
    %210 = vmatprep.subr.mxu0 0.0
    %211 = vmatpush1.xpose.msra.mxu0 %v157
    %212 = vmatprep.subr.mxu0 0.0
    %213 = vmatpush1.xpose.msra.mxu0 %v156
    %214 = vmatprep.subr.mxu0 0.0
    %215 = vmatpush1.xpose.msra.mxu0 %v155
    %216 = vmatprep.subr.mxu0 0.0
    %217 = vmatpush1.xpose.msra.mxu0 %v154
    %218 = vmatprep.subr.mxu0 0.0
    %219 = vmatpush1.xpose.msra.mxu0 %v153
    %220 = vmatprep.subr.mxu0 0.0
    %221 = vmatpush1.xpose.msra.mxu0 %v152
    %222 = vmatprep.subr.mxu0 0.0
    %223 = vmatpush1.xpose.msra.mxu0 %v151
    %224 = vmatprep.subr.mxu0 0.0
    %225 = vmatpush1.xpose.msra.mxu0 %v150
    %226 = vmatprep.subr.mxu0 0.0
    %227 = vmatpush2.xpose.msra.mxu0 %v181
    %228 = vmatprep.subr.mxu0 0.0
    %229 = vmatpush2.xpose.msra.mxu0 %v180
    %230 = vmatprep.subr.mxu0 0.0
    %231 = vmatpush2.xpose.msra.mxu0 %v179
    %232 = vmatprep.subr.mxu0 0.0
    %233 = vmatpush2.xpose.msra.mxu0 %v178
    %234 = vmatprep.subr.mxu0 0.0
    %235 = vmatpush2.xpose.msra.mxu0 %v177
    %236 = vmatprep.subr.mxu0 0.0
    %237 = vmatpush2.xpose.msra.mxu0 %v176
    %238 = vmatprep.subr.mxu0 0.0
    %239 = vmatpush2.xpose.msra.mxu0 %v175
    %240 = vmatprep.subr.mxu0 0.0
    %241 = vmatpush2.xpose.msra.mxu0 %v174
    %242 = vmatprep.subr.mxu0 0.0
    %243 = vmatpush2.xpose.msra.mxu0 %v173
    %244 = vmatprep.subr.mxu0 0.0
    %245 = vmatpush2.xpose.msra.mxu0 %v172
    %246 = vmatprep.subr.mxu0 0.0
    %247 = vmatpush2.xpose.msra.mxu0 %v171
    %248 = vmatprep.subr.mxu0 0.0
    %249 = vmatpush2.xpose.msra.mxu0 %v170
    %250 = vmatprep.subr.mxu0 0.0
    %251 = vmatpush2.xpose.msra.mxu0 %v169
    %252 = vmatprep.subr.mxu0 0.0
    %253 = vmatpush2.xpose.msra.mxu0 %v168
    %254 = vmatprep.subr.mxu0 0.0
    %255 = vmatpush2.xpose.msra.mxu0 %v167
    %256 = vmatprep.subr.mxu0 0.0
    %257 = vmatpush2.xpose.msra.mxu0 %v166
    %258 = vmatprep.mubr.f32.mxu0 0.0
    %259 = vmatmul.mubr.f32.gmra.mxu0 %v149
    %v260 = vpop.f32.mrf.mxu0
    %v261 = vadd.f32 0.0, %v260
    %v262 = vpop.f32.mrf.mxu0
    %v263 = vadd.f32 0.0, %v262
    %264 = vmatprep.mubr.f32.mxu0 0.0
    %265 = vmatmul.mubr.f32.gmra.mxu0 %v193
    %v266 = vpop.f32.mrf.mxu0
    %v267 = vadd.f32 0.0, %v266
    %v268 = vpop.f32.mrf.mxu0
    %269 = vdwg.mxu0
    %v270 = vxor.u32 %v263, 2147483648
    %v271 = vmul.f32 %v270, 1.442695
    %v272 = vpow.pop %v271
    %v273 = vadd.f32 %v272, 1.0
    %v274 = vrcp.pop %v273
    %v275 = vmul.f32 1.0, %v274
    %v276 = vmul.f32 %v267, 1.442695
    %v277 = vpow.pop %v276
    %v278 = vrcp.pop %v277
    %v279 = vsub.f32 %v277, %v278
    %v280 = vmul.f32 %v279, 0.5
    %v281 = vsub.f32 %v261, %v280
    %v282 = vmul.f32 %v275, %v281
    %v283 = vadd.f32 %v280, %v282
    %284 = vst [vmem:[#allocation2] sm:$0xff] %v283
    // Predicated region
    $region14: #{nalu_sinh_forward.3} parent=1 // pred_check
      _
    $region15: #{nalu_sinh_forward.3} parent=1 // pred_check_branch
      %286 = sbr.rel (0) target = $region17
    $region16: #{nalu_sinh_forward.3} parent=1 // pred_region
      %s288 = ssub.s32 128, 128
      %289 = vsyncadd [#allocation3], %s288
      %s291 = sshll.u32 [#allocation2], 4
      %s292 = int_to_ptr.vmem [resolvable:$true] %s291
      %294 = dma.vmem_to_hbm [thread:$0]  %s292, 128, %s3, [#allocation3]
    $region17: #{nalu_sinh_forward.3} parent=1 // pred_fallthru
      _
    // Predicated region
    $region18: #{nalu_sinh_forward.3} parent=1 // pred_check
      _
    $region19: #{nalu_sinh_forward.3} parent=1 // pred_check_branch
      %296 = sbr.rel (0) target = $region21
    $region20: #{nalu_sinh_forward.3} parent=1 // pred_region
      %297 = dma.done [#allocation3], 128
    $region21: #{nalu_sinh_forward.3} parent=1 // pred_fallthru
      _
    %298 = vsyncpa [#allocation3], 1

// kernel: nalu_sinh_forward.2
$region0: #{nalu_sinh_forward.2}
  #allocation0 [shape = 'u32[]', space=smem, size = 0x4, offset = 0x4, fixed_abs, tag = 'smem constant byte address 0x4 - core index']
  #allocation1 [shape = 'u32[144,128]{1,0:T(1,128)}', space=vmem, size = 0x12000, scoped, tag = 'internal scratch']
  %s0 = inlined_call_operand.vmem [shape: f32[128,128], index: 0, kind: input, shape index: {}]
  %s1 = inlined_call_operand.vmem [shape: f32[128,128], index: 1, kind: input, shape index: {}]
  %s2 = inlined_call_operand.vmem [shape: f32[128,128], index: 2, kind: input, shape index: {}]
  %s3 = inlined_call_operand.vmem [shape: f32[128,128], index: 3, kind: input, shape index: {}]
  %s4 = inlined_call_operand.vmem [shape: f32[128,128], index: 4, kind: input, shape index: {}]
  %s5 = inlined_call_operand.vmem [shape: f32[128,128], index: 5, kind: input, shape index: {}]
  %s6 = inlined_call_operand.vmem [shape: f32[256,128], index: 6, kind: output, shape index: {0}]
  %s7 = inlined_call_operand.vmem [shape: f32[256,128], index: 7, kind: output, shape index: {1}]
  %8 = xla_tuple %s6, %s7
  %s9 = sld [smem:[#allocation0]]
  $region42: #{nalu_sinh_forward.2} parent=0
    _
  %s11 = ssub.s32 1, %s9
  %s12 = scalar_select 0, %s11, %s9
  // Predicated region
  $region2: #{nalu_sinh_forward.2} parent=0 // pred_check
    _
  $region3: #{nalu_sinh_forward.2} parent=0 // pred_check_branch
    %14 = sbr.rel (0) target = $region5
  $region4: #{nalu_sinh_forward.2} parent=0 // pred_region
    _
  $region5: #{nalu_sinh_forward.2} parent=0 // pred_fallthru
    _
  // Predicated region
  $region6: #{nalu_sinh_forward.2} parent=0 // pred_check
    _
  $region7: #{nalu_sinh_forward.2} parent=0 // pred_check_branch
    %16 = sbr.rel (0) target = $region9
  $region8: #{nalu_sinh_forward.2} parent=0 // pred_region
    _
  $region9: #{nalu_sinh_forward.2} parent=0 // pred_fallthru
    _
  // Predicated region
  $region10: #{nalu_sinh_forward.2} parent=0 // pred_check
    _
  $region11: #{nalu_sinh_forward.2} parent=0 // pred_check_branch
    %18 = sbr.rel (0) target = $region13
  $region12: #{nalu_sinh_forward.2} parent=0 // pred_region
    _
  $region13: #{nalu_sinh_forward.2} parent=0 // pred_fallthru
    _
  // Predicated region
  $region14: #{nalu_sinh_forward.2} parent=0 // pred_check
    _
  $region15: #{nalu_sinh_forward.2} parent=0 // pred_check_branch
    %20 = sbr.rel (0) target = $region17
  $region16: #{nalu_sinh_forward.2} parent=0 // pred_region
    _
  $region17: #{nalu_sinh_forward.2} parent=0 // pred_fallthru
    _
  // Predicated region
  $region18: #{nalu_sinh_forward.2} parent=0 // pred_check
    _
  $region19: #{nalu_sinh_forward.2} parent=0 // pred_check_branch
    %22 = sbr.rel (0) target = $region21
  $region20: #{nalu_sinh_forward.2} parent=0 // pred_region
    _
  $region21: #{nalu_sinh_forward.2} parent=0 // pred_fallthru
    _
  // Predicated region
  $region22: #{nalu_sinh_forward.2} parent=0 // pred_check
    _
  $region23: #{nalu_sinh_forward.2} parent=0 // pred_check_branch
    %24 = sbr.rel (0) target = $region25
  $region24: #{nalu_sinh_forward.2} parent=0 // pred_region
    _
  $region25: #{nalu_sinh_forward.2} parent=0 // pred_fallthru
    _
  %v25 = vld [vmem:[%s0] sm:$0xff]
  %v26 = vld [vmem:[%s0 + $0x8] sm:$0xff]
  %v27 = vld [vmem:[%s0 + $0x10] sm:$0xff]
  %v28 = vld [vmem:[%s0 + $0x18] sm:$0xff]
  %v29 = vld [vmem:[%s0 + $0x20] sm:$0xff]
  %v30 = vld [vmem:[%s0 + $0x28] sm:$0xff]
  %v31 = vld [vmem:[%s0 + $0x30] sm:$0xff]
  %v32 = vld [vmem:[%s0 + $0x38] sm:$0xff]
  %v33 = vld [vmem:[%s0 + $0x40] sm:$0xff]
  %v34 = vld [vmem:[%s0 + $0x48] sm:$0xff]
  %v35 = vld [vmem:[%s0 + $0x50] sm:$0xff]
  %v36 = vld [vmem:[%s0 + $0x58] sm:$0xff]
  %v37 = vld [vmem:[%s0 + $0x60] sm:$0xff]
  %v38 = vld [vmem:[%s0 + $0x68] sm:$0xff]
  %v39 = vld [vmem:[%s0 + $0x70] sm:$0xff]
  %v40 = vld [vmem:[%s0 + $0x78] sm:$0xff]
  %v41 = vld [vmem:[%s1] sm:$0xff]
  %v42 = vld [vmem:[%s1 + $0x8] sm:$0xff]
  %v43 = vld [vmem:[%s1 + $0x10] sm:$0xff]
  %v44 = vld [vmem:[%s1 + $0x18] sm:$0xff]
  %v45 = vld [vmem:[%s1 + $0x20] sm:$0xff]
  %v46 = vld [vmem:[%s1 + $0x28] sm:$0xff]
  %v47 = vld [vmem:[%s1 + $0x30] sm:$0xff]
  %v48 = vld [vmem:[%s1 + $0x38] sm:$0xff]
  %v49 = vld [vmem:[%s1 + $0x40] sm:$0xff]
  %v50 = vld [vmem:[%s1 + $0x48] sm:$0xff]
  %v51 = vld [vmem:[%s1 + $0x50] sm:$0xff]
  %v52 = vld [vmem:[%s1 + $0x58] sm:$0xff]
  %v53 = vld [vmem:[%s1 + $0x60] sm:$0xff]
  %v54 = vld [vmem:[%s1 + $0x68] sm:$0xff]
  %v55 = vld [vmem:[%s1 + $0x70] sm:$0xff]
  %v56 = vld [vmem:[%s1 + $0x78] sm:$0xff]
  %v57 = vld [vmem:[%s2] sm:$0xff]
  %v58 = vld [vmem:[%s2 + $0x8] sm:$0xff]
  %v59 = vld [vmem:[%s2 + $0x10] sm:$0xff]
  %v60 = vld [vmem:[%s2 + $0x18] sm:$0xff]
  %v61 = vld [vmem:[%s2 + $0x20] sm:$0xff]
  %v62 = vld [vmem:[%s2 + $0x28] sm:$0xff]
  %v63 = vld [vmem:[%s2 + $0x30] sm:$0xff]
  %v64 = vld [vmem:[%s2 + $0x38] sm:$0xff]
  %v65 = vld [vmem:[%s2 + $0x40] sm:$0xff]
  %v66 = vld [vmem:[%s2 + $0x48] sm:$0xff]
  %v67 = vld [vmem:[%s2 + $0x50] sm:$0xff]
  %v68 = vld [vmem:[%s2 + $0x58] sm:$0xff]
  %v69 = vld [vmem:[%s2 + $0x60] sm:$0xff]
  %v70 = vld [vmem:[%s2 + $0x68] sm:$0xff]
  %v71 = vld [vmem:[%s2 + $0x70] sm:$0xff]
  %v72 = vld [vmem:[%s2 + $0x78] sm:$0xff]
  %v73 = vtanh.pop %v25
  %v74 = vtanh.pop %v26
  %v75 = vtanh.pop %v27
  %v76 = vtanh.pop %v28
  %v77 = vtanh.pop %v29
  %v78 = vtanh.pop %v30
  %v79 = vtanh.pop %v31
  %v80 = vtanh.pop %v32
  %v81 = vtanh.pop %v33
  %v82 = vtanh.pop %v34
  %v83 = vtanh.pop %v35
  %v84 = vtanh.pop %v36
  %v85 = vtanh.pop %v37
  %v86 = vtanh.pop %v38
  %v87 = vtanh.pop %v39
  %v88 = vtanh.pop %v40
  %v89 = vxor.u32 %v41, 2147483648
  %v90 = vxor.u32 %v42, 2147483648
  %v91 = vxor.u32 %v43, 2147483648
  %v92 = vxor.u32 %v44, 2147483648
  %v93 = vxor.u32 %v45, 2147483648
  %v94 = vxor.u32 %v46, 2147483648
  %v95 = vxor.u32 %v47, 2147483648
  %v96 = vxor.u32 %v48, 2147483648
  %v97 = vxor.u32 %v49, 2147483648
  %v98 = vxor.u32 %v50, 2147483648
  %v99 = vxor.u32 %v51, 2147483648
  %v100 = vxor.u32 %v52, 2147483648
  %v101 = vxor.u32 %v53, 2147483648
  %v102 = vxor.u32 %v54, 2147483648
  %v103 = vxor.u32 %v55, 2147483648
  %v104 = vxor.u32 %v56, 2147483648
  %v105 = vmul.f32 %v89, 1.442695
  %v106 = vpow.pop %v105
  %v107 = vmul.f32 %v90, 1.442695
  %v108 = vpow.pop %v107
  %v109 = vmul.f32 %v91, 1.442695
  %v110 = vpow.pop %v109
  %v111 = vmul.f32 %v92, 1.442695
  %v112 = vpow.pop %v111
  %v113 = vmul.f32 %v93, 1.442695
  %v114 = vpow.pop %v113
  %v115 = vmul.f32 %v94, 1.442695
  %v116 = vpow.pop %v115
  %v117 = vmul.f32 %v95, 1.442695
  %v118 = vpow.pop %v117
  %v119 = vmul.f32 %v96, 1.442695
  %v120 = vpow.pop %v119
  %v121 = vmul.f32 %v97, 1.442695
  %v122 = vpow.pop %v121
  %v123 = vmul.f32 %v98, 1.442695
  %v124 = vpow.pop %v123
  %v125 = vmul.f32 %v99, 1.442695
  %v126 = vpow.pop %v125
  %v127 = vmul.f32 %v100, 1.442695
  %v128 = vpow.pop %v127
  %v129 = vmul.f32 %v101, 1.442695
  %v130 = vpow.pop %v129
  %v131 = vmul.f32 %v102, 1.442695
  %v132 = vpow.pop %v131
  %v133 = vmul.f32 %v103, 1.442695
  %v134 = vpow.pop %v133
  %v135 = vmul.f32 %v104, 1.442695
  %v136 = vpow.pop %v135
  %v137 = vadd.f32 %v106, 1.0
  %v138 = vadd.f32 %v108, 1.0
  %v139 = vadd.f32 %v110, 1.0
  %v140 = vadd.f32 %v112, 1.0
  %v141 = vadd.f32 %v114, 1.0
  %v142 = vadd.f32 %v116, 1.0
  %v143 = vadd.f32 %v118, 1.0
  %v144 = vadd.f32 %v120, 1.0
  %v145 = vadd.f32 %v122, 1.0
  %v146 = vadd.f32 %v124, 1.0
  %v147 = vadd.f32 %v126, 1.0
  %v148 = vadd.f32 %v128, 1.0
  %v149 = vadd.f32 %v130, 1.0
  %v150 = vadd.f32 %v132, 1.0
  %v151 = vadd.f32 %v134, 1.0
  %v152 = vadd.f32 %v136, 1.0
  %v153 = vrcp.pop %v137
  %v154 = vmul.f32 1.0, %v153
  %v155 = vrcp.pop %v138
  %v156 = vmul.f32 1.0, %v155
  %v157 = vrcp.pop %v139
  %v158 = vmul.f32 1.0, %v157
  %v159 = vrcp.pop %v140
  %v160 = vmul.f32 1.0, %v159
  %v161 = vrcp.pop %v141
  %v162 = vmul.f32 1.0, %v161
  %v163 = vrcp.pop %v142
  %v164 = vmul.f32 1.0, %v163
  %v165 = vrcp.pop %v143
  %v166 = vmul.f32 1.0, %v165
  %v167 = vrcp.pop %v144
  %v168 = vmul.f32 1.0, %v167
  %v169 = vrcp.pop %v145
  %v170 = vmul.f32 1.0, %v169
  %v171 = vrcp.pop %v146
  %v172 = vmul.f32 1.0, %v171
  %v173 = vrcp.pop %v147
  %v174 = vmul.f32 1.0, %v173
  %v175 = vrcp.pop %v148
  %v176 = vmul.f32 1.0, %v175
  %v177 = vrcp.pop %v149
  %v178 = vmul.f32 1.0, %v177
  %v179 = vrcp.pop %v150
  %v180 = vmul.f32 1.0, %v179
  %v181 = vrcp.pop %v151
  %v182 = vmul.f32 1.0, %v181
  %v183 = vrcp.pop %v152
  %v184 = vmul.f32 1.0, %v183
  %v185 = vmul.f32 %v73, %v154
  %v186 = vmul.f32 %v74, %v156
  %v187 = vmul.f32 %v75, %v158
  %v188 = vmul.f32 %v76, %v160
  %v189 = vmul.f32 %v77, %v162
  %v190 = vmul.f32 %v78, %v164
  %v191 = vmul.f32 %v79, %v166
  %v192 = vmul.f32 %v80, %v168
  %v193 = vmul.f32 %v81, %v170
  %v194 = vmul.f32 %v82, %v172
  %v195 = vmul.f32 %v83, %v174
  %v196 = vmul.f32 %v84, %v176
  %v197 = vmul.f32 %v85, %v178
  %v198 = vmul.f32 %v86, %v180
  %v199 = vmul.f32 %v87, %v182
  %v200 = vmul.f32 %v88, %v184
  %201 = vst [vmem:[%s6] sm:$0xff] %v185
  %202 = vst [vmem:[%s6 + $0x8] sm:$0xff] %v186
  %203 = vst [vmem:[%s6 + $0x10] sm:$0xff] %v187
  %204 = vst [vmem:[%s6 + $0x18] sm:$0xff] %v188
  %205 = vst [vmem:[%s6 + $0x20] sm:$0xff] %v189
  %206 = vst [vmem:[%s6 + $0x28] sm:$0xff] %v190
  %207 = vst [vmem:[%s6 + $0x30] sm:$0xff] %v191
  %208 = vst [vmem:[%s6 + $0x38] sm:$0xff] %v192
  %209 = vst [vmem:[%s6 + $0x40] sm:$0xff] %v193
  %210 = vst [vmem:[%s6 + $0x48] sm:$0xff] %v194
  %211 = vst [vmem:[%s6 + $0x50] sm:$0xff] %v195
  %212 = vst [vmem:[%s6 + $0x58] sm:$0xff] %v196
  %213 = vst [vmem:[%s6 + $0x60] sm:$0xff] %v197
  %214 = vst [vmem:[%s6 + $0x68] sm:$0xff] %v198
  %215 = vst [vmem:[%s6 + $0x70] sm:$0xff] %v199
  %216 = vst [vmem:[%s6 + $0x78] sm:$0xff] %v200
  %217 = vst [vmem:[%s6 + $0x80] sm:$0xff] %v57
  %218 = vst [vmem:[%s6 + $0x88] sm:$0xff] %v58
  %219 = vst [vmem:[%s6 + $0x90] sm:$0xff] %v59
  %220 = vst [vmem:[%s6 + $0x98] sm:$0xff] %v60
  %221 = vst [vmem:[%s6 + $0xa0] sm:$0xff] %v61
  %222 = vst [vmem:[%s6 + $0xa8] sm:$0xff] %v62
  %223 = vst [vmem:[%s6 + $0xb0] sm:$0xff] %v63
  %224 = vst [vmem:[%s6 + $0xb8] sm:$0xff] %v64
  %225 = vst [vmem:[%s6 + $0xc0] sm:$0xff] %v65
  %226 = vst [vmem:[%s6 + $0xc8] sm:$0xff] %v66
  %227 = vst [vmem:[%s6 + $0xd0] sm:$0xff] %v67
  %228 = vst [vmem:[%s6 + $0xd8] sm:$0xff] %v68
  %229 = vst [vmem:[%s6 + $0xe0] sm:$0xff] %v69
  %230 = vst [vmem:[%s6 + $0xe8] sm:$0xff] %v70
  %231 = vst [vmem:[%s6 + $0xf0] sm:$0xff] %v71
  %232 = vst [vmem:[%s6 + $0xf8] sm:$0xff] %v72
  %v233 = vld [vmem:[%s3] sm:$0xff]
  %v234 = vld [vmem:[%s3 + $0x8] sm:$0xff]
  %v235 = vld [vmem:[%s3 + $0x10] sm:$0xff]
  %v236 = vld [vmem:[%s3 + $0x18] sm:$0xff]
  %v237 = vld [vmem:[%s3 + $0x20] sm:$0xff]
  %v238 = vld [vmem:[%s3 + $0x28] sm:$0xff]
  %v239 = vld [vmem:[%s3 + $0x30] sm:$0xff]
  %v240 = vld [vmem:[%s3 + $0x38] sm:$0xff]
  %v241 = vld [vmem:[%s3 + $0x40] sm:$0xff]
  %v242 = vld [vmem:[%s3 + $0x48] sm:$0xff]
  %v243 = vld [vmem:[%s3 + $0x50] sm:$0xff]
  %v244 = vld [vmem:[%s3 + $0x58] sm:$0xff]
  %v245 = vld [vmem:[%s3 + $0x60] sm:$0xff]
  %v246 = vld [vmem:[%s3 + $0x68] sm:$0xff]
  %v247 = vld [vmem:[%s3 + $0x70] sm:$0xff]
  %v248 = vld [vmem:[%s3 + $0x78] sm:$0xff]
  %v249 = vld [vmem:[%s4] sm:$0xff]
  %v250 = vld [vmem:[%s4 + $0x8] sm:$0xff]
  %v251 = vld [vmem:[%s4 + $0x10] sm:$0xff]
  %v252 = vld [vmem:[%s4 + $0x18] sm:$0xff]
  %v253 = vld [vmem:[%s4 + $0x20] sm:$0xff]
  %v254 = vld [vmem:[%s4 + $0x28] sm:$0xff]
  %v255 = vld [vmem:[%s4 + $0x30] sm:$0xff]
  %v256 = vld [vmem:[%s4 + $0x38] sm:$0xff]
  %v257 = vld [vmem:[%s4 + $0x40] sm:$0xff]
  %v258 = vld [vmem:[%s4 + $0x48] sm:$0xff]
  %v259 = vld [vmem:[%s4 + $0x50] sm:$0xff]
  %v260 = vld [vmem:[%s4 + $0x58] sm:$0xff]
  %v261 = vld [vmem:[%s4 + $0x60] sm:$0xff]
  %v262 = vld [vmem:[%s4 + $0x68] sm:$0xff]
  %v263 = vld [vmem:[%s4 + $0x70] sm:$0xff]
  %v264 = vld [vmem:[%s4 + $0x78] sm:$0xff]
  %v265 = vld [vmem:[%s5] sm:$0xff]
  %v266 = vld [vmem:[%s5 + $0x8] sm:$0xff]
  %v267 = vld [vmem:[%s5 + $0x10] sm:$0xff]
  %v268 = vld [vmem:[%s5 + $0x18] sm:$0xff]
  %v269 = vld [vmem:[%s5 + $0x20] sm:$0xff]
  %v270 = vld [vmem:[%s5 + $0x28] sm:$0xff]
  %v271 = vld [vmem:[%s5 + $0x30] sm:$0xff]
  %v272 = vld [vmem:[%s5 + $0x38] sm:$0xff]
  %v273 = vld [vmem:[%s5 + $0x40] sm:$0xff]
  %v274 = vld [vmem:[%s5 + $0x48] sm:$0xff]
  %v275 = vld [vmem:[%s5 + $0x50] sm:$0xff]
  %v276 = vld [vmem:[%s5 + $0x58] sm:$0xff]
  %v277 = vld [vmem:[%s5 + $0x60] sm:$0xff]
  %v278 = vld [vmem:[%s5 + $0x68] sm:$0xff]
  %v279 = vld [vmem:[%s5 + $0x70] sm:$0xff]
  %v280 = vld [vmem:[%s5 + $0x78] sm:$0xff]
  %v281 = vtanh.pop %v233
  %v282 = vtanh.pop %v234
  %v283 = vtanh.pop %v235
  %v284 = vtanh.pop %v236
  %v285 = vtanh.pop %v237
  %v286 = vtanh.pop %v238
  %v287 = vtanh.pop %v239
  %v288 = vtanh.pop %v240
  %v289 = vtanh.pop %v241
  %v290 = vtanh.pop %v242
  %v291 = vtanh.pop %v243
  %v292 = vtanh.pop %v244
  %v293 = vtanh.pop %v245
  %v294 = vtanh.pop %v246
  %v295 = vtanh.pop %v247
  %v296 = vtanh.pop %v248
  %v297 = vxor.u32 %v249, 2147483648
  %v298 = vxor.u32 %v250, 2147483648
  %v299 = vxor.u32 %v251, 2147483648
  %v300 = vxor.u32 %v252, 2147483648
  %v301 = vxor.u32 %v253, 2147483648
  %v302 = vxor.u32 %v254, 2147483648
  %v303 = vxor.u32 %v255, 2147483648
  %v304 = vxor.u32 %v256, 2147483648
  %v305 = vxor.u32 %v257, 2147483648
  %v306 = vxor.u32 %v258, 2147483648
  %v307 = vxor.u32 %v259, 2147483648
  %v308 = vxor.u32 %v260, 2147483648
  %v309 = vxor.u32 %v261, 2147483648
  %v310 = vxor.u32 %v262, 2147483648
  %v311 = vxor.u32 %v263, 2147483648
  %v312 = vxor.u32 %v264, 2147483648
  %v313 = vmul.f32 %v297, 1.442695
  %v314 = vpow.pop %v313
  %v315 = vmul.f32 %v298, 1.442695
  %v316 = vpow.pop %v315
  %v317 = vmul.f32 %v299, 1.442695
  %v318 = vpow.pop %v317
  %v319 = vmul.f32 %v300, 1.442695
  %v320 = vpow.pop %v319
  %v321 = vmul.f32 %v301, 1.442695
  %v322 = vpow.pop %v321
  %v323 = vmul.f32 %v302, 1.442695
  %v324 = vpow.pop %v323
  %v325 = vmul.f32 %v303, 1.442695
  %v326 = vpow.pop %v325
  %v327 = vmul.f32 %v304, 1.442695
  %v328 = vpow.pop %v327
  %v329 = vmul.f32 %v305, 1.442695
  %v330 = vpow.pop %v329
  %v331 = vmul.f32 %v306, 1.442695
  %v332 = vpow.pop %v331
  %v333 = vmul.f32 %v307, 1.442695
  %v334 = vpow.pop %v333
  %v335 = vmul.f32 %v308, 1.442695
  %v336 = vpow.pop %v335
  %v337 = vmul.f32 %v309, 1.442695
  %v338 = vpow.pop %v337
  %v339 = vmul.f32 %v310, 1.442695
  %v340 = vpow.pop %v339
  %v341 = vmul.f32 %v311, 1.442695
  %v342 = vpow.pop %v341
  %v343 = vmul.f32 %v312, 1.442695
  %v344 = vpow.pop %v343
  %v345 = vadd.f32 %v314, 1.0
  %v346 = vadd.f32 %v316, 1.0
  %v347 = vadd.f32 %v318, 1.0
  %v348 = vadd.f32 %v320, 1.0
  %v349 = vadd.f32 %v322, 1.0
  %v350 = vadd.f32 %v324, 1.0
  %v351 = vadd.f32 %v326, 1.0
  %v352 = vadd.f32 %v328, 1.0
  %v353 = vadd.f32 %v330, 1.0
  %v354 = vadd.f32 %v332, 1.0
  %v355 = vadd.f32 %v334, 1.0
  %v356 = vadd.f32 %v336, 1.0
  %v357 = vadd.f32 %v338, 1.0
  %v358 = vadd.f32 %v340, 1.0
  %v359 = vadd.f32 %v342, 1.0
  %v360 = vadd.f32 %v344, 1.0
  %v361 = vrcp.pop %v345
  %v362 = vmul.f32 1.0, %v361
  %v363 = vrcp.pop %v346
  %v364 = vmul.f32 1.0, %v363
  %v365 = vrcp.pop %v347
  %v366 = vmul.f32 1.0, %v365
  %v367 = vrcp.pop %v348
  %v368 = vmul.f32 1.0, %v367
  %v369 = vrcp.pop %v349
  %v370 = vmul.f32 1.0, %v369
  %v371 = vrcp.pop %v350
  %v372 = vmul.f32 1.0, %v371
  %v373 = vrcp.pop %v351
  %v374 = vmul.f32 1.0, %v373
  %v375 = vrcp.pop %v352
  %v376 = vmul.f32 1.0, %v375
  %v377 = vrcp.pop %v353
  %v378 = vmul.f32 1.0, %v377
  %v379 = vrcp.pop %v354
  %v380 = vmul.f32 1.0, %v379
  %v381 = vrcp.pop %v355
  %v382 = vmul.f32 1.0, %v381
  %v383 = vrcp.pop %v356
  %v384 = vmul.f32 1.0, %v383
  %v385 = vrcp.pop %v357
  %v386 = vmul.f32 1.0, %v385
  %v387 = vrcp.pop %v358
  %v388 = vmul.f32 1.0, %v387
  %v389 = vrcp.pop %v359
  %v390 = vmul.f32 1.0, %v389
  %v391 = vrcp.pop %v360
  %v392 = vmul.f32 1.0, %v391
  %v393 = vmul.f32 %v281, %v362
  %v394 = vmul.f32 %v282, %v364
  %v395 = vmul.f32 %v283, %v366
  %v396 = vmul.f32 %v284, %v368
  %v397 = vmul.f32 %v285, %v370
  %v398 = vmul.f32 %v286, %v372
  %v399 = vmul.f32 %v287, %v374
  %v400 = vmul.f32 %v288, %v376
  %v401 = vmul.f32 %v289, %v378
  %v402 = vmul.f32 %v290, %v380
  %v403 = vmul.f32 %v291, %v382
  %v404 = vmul.f32 %v292, %v384
  %v405 = vmul.f32 %v293, %v386
  %v406 = vmul.f32 %v294, %v388
  %v407 = vmul.f32 %v295, %v390
  %v408 = vmul.f32 %v296, %v392
  %409 = vst [vmem:[%s7] sm:$0xff] %v393
  %410 = vst [vmem:[%s7 + $0x8] sm:$0xff] %v394
  %411 = vst [vmem:[%s7 + $0x10] sm:$0xff] %v395
  %412 = vst [vmem:[%s7 + $0x18] sm:$0xff] %v396
  %413 = vst [vmem:[%s7 + $0x20] sm:$0xff] %v397
  %414 = vst [vmem:[%s7 + $0x28] sm:$0xff] %v398
  %415 = vst [vmem:[%s7 + $0x30] sm:$0xff] %v399
  %416 = vst [vmem:[%s7 + $0x38] sm:$0xff] %v400
  %417 = vst [vmem:[%s7 + $0x40] sm:$0xff] %v401
  %418 = vst [vmem:[%s7 + $0x48] sm:$0xff] %v402
  %419 = vst [vmem:[%s7 + $0x50] sm:$0xff] %v403
  %420 = vst [vmem:[%s7 + $0x58] sm:$0xff] %v404
  %421 = vst [vmem:[%s7 + $0x60] sm:$0xff] %v405
  %422 = vst [vmem:[%s7 + $0x68] sm:$0xff] %v406
  %423 = vst [vmem:[%s7 + $0x70] sm:$0xff] %v407
  %424 = vst [vmem:[%s7 + $0x78] sm:$0xff] %v408
  %425 = vst [vmem:[%s7 + $0x80] sm:$0xff] %v265
  %426 = vst [vmem:[%s7 + $0x88] sm:$0xff] %v266
  %427 = vst [vmem:[%s7 + $0x90] sm:$0xff] %v267
  %428 = vst [vmem:[%s7 + $0x98] sm:$0xff] %v268
  %429 = vst [vmem:[%s7 + $0xa0] sm:$0xff] %v269
  %430 = vst [vmem:[%s7 + $0xa8] sm:$0xff] %v270
  %431 = vst [vmem:[%s7 + $0xb0] sm:$0xff] %v271
  %432 = vst [vmem:[%s7 + $0xb8] sm:$0xff] %v272
  %433 = vst [vmem:[%s7 + $0xc0] sm:$0xff] %v273
  %434 = vst [vmem:[%s7 + $0xc8] sm:$0xff] %v274
  %435 = vst [vmem:[%s7 + $0xd0] sm:$0xff] %v275
  %436 = vst [vmem:[%s7 + $0xd8] sm:$0xff] %v276
  %437 = vst [vmem:[%s7 + $0xe0] sm:$0xff] %v277
  %438 = vst [vmem:[%s7 + $0xe8] sm:$0xff] %v278
  %439 = vst [vmem:[%s7 + $0xf0] sm:$0xff] %v279
  %440 = vst [vmem:[%s7 + $0xf8] sm:$0xff] %v280
  // Predicated region
  $region26: #{nalu_sinh_forward.2} parent=0 // pred_check
    _
  $region27: #{nalu_sinh_forward.2} parent=0 // pred_check_branch
    %442 = sbr.rel (0) target = $region29
  $region28: #{nalu_sinh_forward.2} parent=0 // pred_region
    _
  $region29: #{nalu_sinh_forward.2} parent=0 // pred_fallthru
    _
  // Predicated region
  $region30: #{nalu_sinh_forward.2} parent=0 // pred_check
    _
  $region31: #{nalu_sinh_forward.2} parent=0 // pred_check_branch
    %444 = sbr.rel (0) target = $region33
  $region32: #{nalu_sinh_forward.2} parent=0 // pred_region
    _
  $region33: #{nalu_sinh_forward.2} parent=0 // pred_fallthru
    _
  // Predicated region
  $region34: #{nalu_sinh_forward.2} parent=0 // pred_check
    _
  $region35: #{nalu_sinh_forward.2} parent=0 // pred_check_branch
    %446 = sbr.rel (0) target = $region37
  $region36: #{nalu_sinh_forward.2} parent=0 // pred_region
    _
  $region37: #{nalu_sinh_forward.2} parent=0 // pred_fallthru
    _
  // Predicated region
  $region38: #{nalu_sinh_forward.2} parent=0 // pred_check
    _
  $region39: #{nalu_sinh_forward.2} parent=0 // pred_check_branch
    %448 = sbr.rel (0) target = $region41
  $region40: #{nalu_sinh_forward.2} parent=0 // pred_region
    _
  $region41: #{nalu_sinh_forward.2} parent=0 // pred_fallthru
    _

</llo_original>
